<compile_context>
chip_gen: v7x
topology: tpu7x:2x2x1
jax: 0.10.0
libtpu: 0.0.40
codegen_flags: <defaults>
</compile_context>

<pallas_src>
import functools
import math

import jax
import jax.numpy as jnp
from jax.experimental import pallas as pl
from jax.experimental.pallas import tpu as pltpu

LANE = 128
MAX_BLOCK_ROWS = 8192                    # 8192*128*4B = 4 MiB per f32 input buffer
_VMEM_LIMIT_BYTES = 40 * 1024 * 1024     # 2 streams x 2 bufs x 4 MiB = 16 MiB + headroom
_LN2 = math.log(2.0)


def _row_granularity(dtype) -> int:
    """Sublane tiling granularity for a streamed dtype (8 / 16 / 32 rows)."""
    itemsize = jnp.dtype(dtype).itemsize
    return 8 * max(1, 4 // itemsize)


def _tensorcores_per_chip() -> int:
    """Best-effort TensorCores-per-chip count (2 on v7x, 1 on v5e/v6e)."""
    try:
        kind = str(jax.devices()[0].device_kind).lower()
    except Exception:
        return 1
    return 2 if "v7" in kind else 1


_NUM_TC = _tensorcores_per_chip()


def _bce_dice_sums_kernel(p_ref, t_ref, acc_ref):
    """acc rows: 0=sum(log-likelihood), 1=sum(p*t), 2=sum(p), 3=sum(t), 4-7=0."""
    i = pl.program_id(1)  # reduction axis (last): tile index within this slab

    @pl.when(i == 0)
    def _():
        acc_ref[...] = jnp.zeros_like(acc_ref)

    # Stream in native dtype, upcast in-kernel (free VPU filler on a mem-bound kernel).
    p = p_ref[...].astype(jnp.float32)
    t = t_ref[...].astype(jnp.float32)

    # PyTorch BCELoss clamps log outputs at -100.  Accumulate the *positive*
    # log-likelihood  ll = t*log(p) + (1-t)*log(1-p)  rewritten as
    # log1p(-p) + t*(log(p) - log1p(-p))  (fewer VPU ops); negate once in glue.
    log_p = jnp.maximum(jnp.log(p), -100.0)
    log_1mp = jnp.maximum(jnp.log1p(-p), -100.0)
    ll = log_1mp + t * (log_p - log_1mp)
    # TODO(synk): if targets were guaranteed hard {0,1}, a single log of
    # jnp.where(t > 0.5, p, 1 - p) would halve EUP traffic (matters on v7x only).

    # Single merged, full-vreg (8,128) accumulator update (rows 4-7 stay zero
    # so the += is an unmasked vector op/store).
    partial = jnp.concatenate(
        [
            jnp.sum(ll, axis=0, keepdims=True),
            jnp.sum(p * t, axis=0, keepdims=True),
            jnp.sum(p, axis=0, keepdims=True),
            jnp.sum(t, axis=0, keepdims=True),
            jnp.zeros((4, LANE), jnp.float32),
        ],
        axis=0,
    )
    acc_ref[...] += partial


def _run_sums_kernel(p2, t2, num_slabs, tiles_per_slab, block_rows):
    """Streams (rows_main, LANE) inputs; returns (4,) partial sums."""
    in_map = lambda c, i: (c * tiles_per_slab + i, 0)
    lead_sem = pltpu.CORE_PARALLEL if num_slabs > 1 else pltpu.ARBITRARY
    acc = pl.pallas_call(
        _bce_dice_sums_kernel,
        out_shape=jax.ShapeDtypeStruct((num_slabs, 8, LANE), jnp.float32),
        grid_spec=pltpu.PrefetchScalarGridSpec(
            num_scalar_prefetch=0,
            grid=(num_slabs, tiles_per_slab),
            in_specs=[
                pl.BlockSpec((block_rows, LANE), in_map),
                pl.BlockSpec((block_rows, LANE), in_map),
            ],
            out_specs=pl.BlockSpec((None, 8, LANE), lambda c, i: (c, 0, 0)),
        ),
        compiler_params=pltpu.CompilerParams(
            dimension_semantics=(lead_sem, pltpu.ARBITRARY),
            vmem_limit_bytes=_VMEM_LIMIT_BYTES,
        ),
    )(p2, t2)
    return jnp.sum(acc, axis=(0, 2))[:4]  # cross-slab + cross-lane combine (glue)


def _partial_sums_dense(pf, tf):
    """Plain-JAX partial sums for the (tiny) un-streamed remainder."""
    pf = pf.astype(jnp.float32)
    tf = tf.astype(jnp.float32)
    log_p = jnp.maximum(jnp.log(pf), -100.0)
    log_1mp = jnp.maximum(jnp.log1p(-pf), -100.0)
    ll = jnp.sum(log_1mp + tf * (log_p - log_1mp))
    return jnp.stack([ll, jnp.sum(pf * tf), jnp.sum(pf), jnp.sum(tf)])


@functools.partial(jax.jit, static_argnames=("penalty_weight",))
def bce_dice_loss(pred, target, penalty_weight=None):
    """Returns (loss, bce_loss, dice_loss) matching BCEDiceLoss.forward."""
    p = pred.reshape(-1)
    t = target.reshape(-1)
    n = p.shape[0]

    gran = max(_row_granularity(p.dtype), _row_granularity(t.dtype))
    rows_total = n // LANE
    if rows_total >= gran:
        # Main path: stream the tile-aligned prefix, no padding, no mask.
        num_slabs = 2 if (_NUM_TC > 1 and rows_total >= 2 * gran) else 1
        rows_per_slab = rows_total // num_slabs
        # Pick the tile count first so the un-streamed tail stays tiny
        # (< tiles_per_slab * gran rows per slab), then the largest aligned tile.
        tiles_per_slab = (rows_per_slab + MAX_BLOCK_ROWS - 1) // MAX_BLOCK_ROWS
        block_rows = ((rows_per_slab // tiles_per_slab) // gran) * gran
        rows_main = num_slabs * tiles_per_slab * block_rows
        n_main = rows_main * LANE

        p2 = p[:n_main].reshape(rows_main, LANE)   # contiguous prefix: free
        t2 = t[:n_main].reshape(rows_main, LANE)
        sums = _run_sums_kernel(p2, t2, num_slabs, tiles_per_slab, block_rows)

        if n_main < n:  # fold the tiny remainder in plain JAX
            sums = sums + _partial_sums_dense(p[n_main:], t[n_main:])
    else:
        # Tiny input (< one tile): pad it (trivial) and subtract the analytically
        # known padding contribution (no mask stream needed).
        pad = gran * LANE - n
        p2 = jnp.pad(p.astype(jnp.float32), (0, pad),
                     constant_values=0.5).reshape(gran, LANE)
        t2 = jnp.pad(t.astype(jnp.float32), (0, pad),
                     constant_values=0.0).reshape(gran, LANE)
        sums = _run_sums_kernel(p2, t2, 1, 1, gran)
        # Each pad element contributes log(0.5) = -ln2 to the ll sum, 0.5 to sum(p).
        corr = jnp.array([-pad * _LN2, 0.0, 0.5 * pad, 0.0], jnp.float32)
        sums = sums - corr

    ll_sum, pt_sum, p_sum, t_sum = sums[0], sums[1], sums[2], sums[3]

    bce = -ll_sum / jnp.float32(n)
    dice_coef = (2.0 * pt_sum + 1.0) / (p_sum + t_sum + 1.0)
    dice_loss = 1.0 - dice_coef
    if penalty_weight:  # truthiness check, matching PyTorch's `if self.penalty_weight:`
        dice_loss = jnp.float32(penalty_weight) * dice_loss
    loss = bce + dice_loss
    return loss, bce, dice_loss


def _reference(pred, target):
    p = pred.reshape(-1).astype(jnp.float32)
    t = target.reshape(-1).astype(jnp.float32)
    bce = jnp.mean(-(t * jnp.log(p) + (1.0 - t) * jnp.log(1.0 - p)))
    dice_coef = (2.0 * jnp.sum(p * t) + 1.0) / (jnp.sum(p) + jnp.sum(t) + 1.0)
    dice_loss = 1.0 - dice_coef
    return bce + dice_loss, bce, dice_loss


if __name__ == "__main__":
    key = jax.random.PRNGKey(0)
    k1, k2 = jax.random.split(key)

    # Predictions must be probabilities in (0, 1) (BCELoss requirement).
    pred = jax.random.uniform(k1, (2, 4, 16, 16), jnp.float32, 1e-3, 1.0 - 1e-3)
    target = (jax.random.uniform(k2, (2, 4, 16, 16)) > 0.5).astype(jnp.float32)

    loss, bce, dice = bce_dice_loss(pred, target)
    jax.block_until_ready((loss, bce, dice))

    loss_r, bce_r, dice_r = _reference(pred, target)
    assert jnp.allclose(loss, loss_r, rtol=1e-5, atol=1e-5)
    assert jnp.allclose(bce, bce_r, rtol=1e-5, atol=1e-5)
    assert jnp.allclose(dice, dice_r, rtol=1e-5, atol=1e-5)

    # Non tile-aligned shape: exercises the plain-JAX remainder fold-in path.
    k3, k4 = jax.random.split(k2)
    pred_b = jax.random.uniform(k3, (2, 3, 17, 13), jnp.float32, 1e-3, 1.0 - 1e-3)
    target_b = (jax.random.uniform(k4, (2, 3, 17, 13)) > 0.5).astype(jnp.float32)
    out_b = bce_dice_loss(pred_b, target_b)
    jax.block_until_ready(out_b)
    ref_b = _reference(pred_b, target_b)
    for a, b in zip(out_b, ref_b):
        assert jnp.allclose(a, b, rtol=1e-5, atol=1e-5)

    print("KERNEL_OK")
</pallas_src>

<mosaic_0001>
module attributes {stable_mosaic.version = 11 : i64} {
  func.func @_bce_dice_sums_kernel(%arg0: i32, %arg1: i32, %arg2: memref<16x128xf32, #tpu.memory_space<vmem>>, %arg3: memref<16x128xf32, #tpu.memory_space<vmem>>, %arg4: memref<1x8x128xf32, #tpu.memory_space<vmem>>) attributes {dimension_semantics = [#tpu.dimension_semantics<arbitrary>, #tpu.dimension_semantics<arbitrary>], iteration_bounds = array<i64: 1, 1>, scalar_prefetch = 0 : i64, scratch_operands = 0 : i64, tpu.core_type = #tpu.core_type<tc>, window_params = [{transform_indices = @transform_0, window_bounds = array<i64: 16, 128>}, {transform_indices = @transform_1, window_bounds = array<i64: 16, 128>}, {transform_indices = @transform_2, window_bounds = array<i64: 1, 8, 128>}]} {
    %c0_i32 = arith.constant 0 : i32
    %0 = arith.cmpi eq, %arg1, %c0_i32 : i32
    %1 = arith.extui %0 : i1 to i32
    %c0_i32_0 = arith.constant 0 : i32
    %2 = arith.cmpi ne, %1, %c0_i32_0 : i32
    scf.if %2 {
      %cst_17 = arith.constant 0.000000e+00 : f32
      %33 = vector.broadcast %cst_17 : f32 to vector<8x128xf32>
      %c0_18 = arith.constant 0 : index
      %c0_19 = arith.constant 0 : index
      %c0_20 = arith.constant 0 : index
      %34 = vector.load %arg4[%c0_18, %c0_19, %c0_20] : memref<1x8x128xf32, #tpu.memory_space<vmem>>, vector<1x8x128xf32>
      %35 = vector.shape_cast %34 : vector<1x8x128xf32> to vector<8x128xf32>
      %36 = vector.shape_cast %33 : vector<8x128xf32> to vector<1x8x128xf32>
      tpu.vector_store %arg4[%c0_18, %c0_19, %c0_20], %36 {strides = array<i32>} : memref<1x8x128xf32, #tpu.memory_space<vmem>>, vector<1x8x128xf32>,
    } else {
    }
    %c0 = arith.constant 0 : index
    %c0_1 = arith.constant 0 : index
    %3 = vector.load %arg2[%c0, %c0_1] : memref<16x128xf32, #tpu.memory_space<vmem>>, vector<16x128xf32>
    %c0_2 = arith.constant 0 : index
    %c0_3 = arith.constant 0 : index
    %4 = vector.load %arg3[%c0_2, %c0_3] : memref<16x128xf32, #tpu.memory_space<vmem>>, vector<16x128xf32>
    %5 = math.log %3 : vector<16x128xf32>
    %cst = arith.constant -1.000000e+02 : f32
    %6 = vector.broadcast %cst : f32 to vector<16x128xf32>
    %7 = arith.maximumf %5, %6 : vector<16x128xf32>
    %cst_4 = arith.constant 0.000000e+00 : f32
    %8 = vector.broadcast %cst_4 : f32 to vector<16x128xf32>
    %9 = arith.subf %8, %3 : vector<16x128xf32>
    %10 = math.log1p %9 : vector<16x128xf32>
    %cst_5 = arith.constant -1.000000e+02 : f32
    %11 = vector.broadcast %cst_5 : f32 to vector<16x128xf32>
    %12 = arith.maximumf %10, %11 : vector<16x128xf32>
    %13 = arith.subf %7, %12 : vector<16x128xf32>
    %14 = arith.mulf %4, %13 : vector<16x128xf32>
    %15 = arith.addf %12, %14 : vector<16x128xf32>
    %cst_6 = arith.constant dense<0.000000e+00> : vector<128xf32>
    %16 = vector.multi_reduction <add>, %15, %cst_6 [0] : vector<16x128xf32> to vector<128xf32>
    %17 = vector.shape_cast %16 : vector<128xf32> to vector<1x128xf32>
    %18 = arith.mulf %3, %4 : vector<16x128xf32>
    %cst_7 = arith.constant dense<0.000000e+00> : vector<128xf32>
    %19 = vector.multi_reduction <add>, %18, %cst_7 [0] : vector<16x128xf32> to vector<128xf32>
    %20 = vector.shape_cast %19 : vector<128xf32> to vector<1x128xf32>
    %cst_8 = arith.constant dense<0.000000e+00> : vector<128xf32>
    %21 = vector.multi_reduction <add>, %3, %cst_8 [0] : vector<16x128xf32> to vector<128xf32>
    %22 = vector.shape_cast %21 : vector<128xf32> to vector<1x128xf32>
    %cst_9 = arith.constant dense<0.000000e+00> : vector<128xf32>
    %23 = vector.multi_reduction <add>, %4, %cst_9 [0] : vector<16x128xf32> to vector<128xf32>
    %24 = vector.shape_cast %23 : vector<128xf32> to vector<1x128xf32>
    %cst_10 = arith.constant 0.000000e+00 : f32
    %25 = vector.broadcast %cst_10 : f32 to vector<4x128xf32>
    %26 = tpu.concatenate %17, %20, %22, %24, %25 in 0 : vector<1x128xf32>, vector<1x128xf32>, vector<1x128xf32>, vector<1x128xf32>, vector<4x128xf32> -> vector<8x128xf32>
    %c0_11 = arith.constant 0 : index
    %c0_12 = arith.constant 0 : index
    %c0_13 = arith.constant 0 : index
    %27 = vector.load %arg4[%c0_11, %c0_12, %c0_13] : memref<1x8x128xf32, #tpu.memory_space<vmem>>, vector<1x8x128xf32>
    %28 = vector.shape_cast %27 : vector<1x8x128xf32> to vector<8x128xf32>
    %29 = arith.addf %28, %26 : vector<8x128xf32>
    %c0_14 = arith.constant 0 : index
    %c0_15 = arith.constant 0 : index
    %c0_16 = arith.constant 0 : index
    %30 = vector.load %arg4[%c0_14, %c0_15, %c0_16] : memref<1x8x128xf32, #tpu.memory_space<vmem>>, vector<1x8x128xf32>
    %31 = vector.shape_cast %30 : vector<1x8x128xf32> to vector<8x128xf32>
    %32 = vector.shape_cast %29 : vector<8x128xf32> to vector<1x8x128xf32>
    tpu.vector_store %arg4[%c0_14, %c0_15, %c0_16], %32 {strides = array<i32>} : memref<1x8x128xf32, #tpu.memory_space<vmem>>, vector<1x8x128xf32>,
    return
  }
  func.func @transform_0(%arg0: i32, %arg1: i32) -> (i32, i32) {
    %c1_i32 = arith.constant 1 : i32
    %0 = arith.muli %arg0, %c1_i32 : i32
    %1 = arith.addi %0, %arg1 : i32
    %c0_i32 = arith.constant 0 : i32
    %c0_i32_0 = arith.constant 0 : i32
    return %1, %c0_i32 : i32, i32
  }
  func.func @transform_1(%arg0: i32, %arg1: i32) -> (i32, i32) {
    %c1_i32 = arith.constant 1 : i32
    %0 = arith.muli %arg0, %c1_i32 : i32
    %1 = arith.addi %0, %arg1 : i32
    %c0_i32 = arith.constant 0 : i32
    %c0_i32_0 = arith.constant 0 : i32
    return %1, %c0_i32 : i32, i32
  }
  func.func @transform_2(%arg0: i32, %arg1: i32) -> (i32, i32, i32) {
    %c0_i32 = arith.constant 0 : i32
    %c0_i32_0 = arith.constant 0 : i32
    %c0_i32_1 = arith.constant 0 : i32
    return %arg0, %c0_i32, %c0_i32_0 : i32, i32, i32
  }
}

</mosaic_0001>

<llo_original>
// kernel: bce_dice_loss.1
$region0: #{bce_dice_loss.1}
  #allocation0 [shape = 'u32[]', space=smem, size = 0x4, offset = 0x4, fixed_abs, tag = 'smem constant byte address 0x4 - core index']
  #allocation1 [shape = 'u32[144,128]{1,0:T(1,128)}', space=vmem, size = 0x12000, scoped, tag = 'internal scratch']
  %s0 = inlined_call_operand.vmem [shape: f32[16,128], index: 0, kind: input, shape index: {}]
  %s1 = inlined_call_operand.vmem [shape: f32[16,128], index: 1, kind: input, shape index: {}]
  %s2 = inlined_call_operand.vmem [shape: f32[1,8,128], index: 2, kind: output, shape index: {}]
  %s3 = sld [smem:[#allocation0]]
  $region22: #{bce_dice_loss.1} parent=0
    _
  %s5 = ssub.s32 1, %s3
  %s6 = scalar_select 0, %s5, %s3
  // Predicated region
  $region2: #{bce_dice_loss.1} parent=0 // pred_check
    _
  $region3: #{bce_dice_loss.1} parent=0 // pred_check_branch
    %8 = sbr.rel (0) target = $region5
  $region4: #{bce_dice_loss.1} parent=0 // pred_region
    %s9 = sadd.s32 0, 0
    %s10 = smul.u32 2, %s9
    %p11 = scmp.lt.s32.totalorder %s10, 1
    %s12 = scalar_select %p11, %s10, 1
    %s13 = smul.addr %s12, 8
    %s14 = scalar_lea.vmem %s0, %s13
    %s15 = sadd.s32 0, 0
    %s16 = smul.u32 2, %s15
  $region5: #{bce_dice_loss.1} parent=0 // pred_fallthru
    _
  // Predicated region
  $region6: #{bce_dice_loss.1} parent=0 // pred_check
    _
  $region7: #{bce_dice_loss.1} parent=0 // pred_check_branch
    %18 = sbr.rel (0) target = $region9
  $region8: #{bce_dice_loss.1} parent=0 // pred_region
    %s19 = sadd.s32 0, 0
    %s20 = smul.u32 2, %s19
    %p21 = scmp.lt.s32.totalorder %s20, 1
    %s22 = scalar_select %p21, %s20, 1
    %s23 = smul.addr %s22, 8
    %s24 = scalar_lea.vmem %s1, %s23
    %s25 = sadd.s32 0, 0
    %s26 = smul.u32 2, %s25
  $region9: #{bce_dice_loss.1} parent=0 // pred_fallthru
    _
  %s27 = sadd.s32 0, 0
  %s28 = smul.u32 2, %s27
  %p29 = scmp.lt.s32.totalorder %s28, 1
  %s30 = scalar_select %p29, %s28, 1
  %s31 = smul.addr %s30, 8
  %s32 = scalar_lea.vmem %s0, %s31
  %s33 = sadd.s32 0, 0
  %s34 = smul.u32 2, %s33
  %p35 = scmp.lt.s32.totalorder %s34, 1
  %s36 = scalar_select %p35, %s34, 1
  %s37 = smul.addr %s36, 8
  %s38 = scalar_lea.vmem %s1, %s37
  %s39 = sadd.s32 0, 0
  %s40 = smul.u32 2, %s39
  %p41 = scmp.lt.s32.totalorder %s40, 1
  %s42 = scalar_select %p41, %s40, 1
  %s43 = smul.addr %s42, 8
  %s44 = scalar_lea.vmem %s0, %s43
  %s45 = sadd.s32 0, 0
  %s46 = smul.u32 2, %s45
  %s47 = sadd.s32 0, 0
  %s48 = smul.u32 2, %s47
  %p49 = scmp.lt.s32.totalorder %s48, 1
  %s50 = scalar_select %p49, %s48, 1
  %s51 = smul.addr %s50, 8
  %s52 = scalar_lea.vmem %s1, %s51
  %s53 = sadd.s32 0, 0
  %s54 = smul.u32 2, %s53
  %p55 = scmp.eq.s32.totalorder 0, 0
  // Predicated region
  $region10: #{bce_dice_loss.1} parent=0 // pred_check
    %p56 = pneg %p55
  $region11: #{bce_dice_loss.1} parent=0 // pred_check_branch
    %58 = sbr.rel (%p56) target = $region13
  $region12: #{bce_dice_loss.1} parent=0 // pred_region
    %59 = vst [vmem:[%s2] sm:$0xff] 0.0
  $region13: #{bce_dice_loss.1} parent=0 // pred_fallthru
    _
  %v60 = vld [vmem:[%s44] sm:$0xff]
  %v61 = vld [vmem:[%s44 + $0x8] sm:$0xff]
  %v62 = vld [vmem:[%s52] sm:$0xff]
  %v63 = vld [vmem:[%s52 + $0x8] sm:$0xff]
  %v64 = vlog2.pop %v60
  %v65 = vmul.f32 %v64, 0.6931472
  %v66 = vlog2.pop %v61
  %v67 = vmul.f32 %v66, 0.6931472
  %v68 = vmax.f32 %v65, -100.0
  %v69 = vmax.f32 %v67, -100.0
  %v70 = vsub.f32 0.0, %v60
  %v71 = vsub.f32 0.0, %v61
  %v72 = vadd.f32 %v70, 1.0
  %v73 = vlog2.pop %v72
  %v74 = vmul.f32 %v73, 0.6931472
  %v75 = vmul.f32 -0.5, %v70
  %v76 = vadd.f32 %v75, 1.0
  %v77 = vmul.f32 %v76, %v70
  %v78 = vand.u32 2147483647, %v70
  %vm79 = vcmp.lt.f32.partialorder %v78, 0.0004427343
  %v80 = vsel %vm79, %v77, %v74
  %v81 = vadd.f32 %v71, 1.0
  %v82 = vlog2.pop %v81
  %v83 = vmul.f32 %v82, 0.6931472
  %v84 = vmul.f32 -0.5, %v71
  %v85 = vadd.f32 %v84, 1.0
  %v86 = vmul.f32 %v85, %v71
  %v87 = vand.u32 2147483647, %v71
  %vm88 = vcmp.lt.f32.partialorder %v87, 0.0004427343
  %v89 = vsel %vm88, %v86, %v83
  %v90 = vmax.f32 %v80, -100.0
  %v91 = vmax.f32 %v89, -100.0
  %v92 = vsub.f32 %v68, %v90
  %v93 = vsub.f32 %v69, %v91
  %v94 = vmul.f32 %v62, %v92
  %v95 = vmul.f32 %v63, %v93
  %v96 = vadd.f32 %v90, %v94
  %v97 = vadd.f32 %v91, %v95
  %v98 = vadd.f32 %v96, %v97
  %v99 = vrot.slane %v98, 4
  %v100 = vadd.f32 %v98, %v99
  %v101 = vrot.slane %v100, 2
  %v102 = vadd.f32 %v100, %v101
  %v103 = vrot.slane %v102, 1
  %v104 = vadd.f32 %v102, %v103
  %v105 = vmul.f32 %v60, %v62
  %v106 = vmul.f32 %v61, %v63
  %v107 = vadd.f32 %v105, %v106
  %v108 = vrot.slane %v107, 4
  %v109 = vadd.f32 %v107, %v108
  %v110 = vrot.slane %v109, 2
  %v111 = vadd.f32 %v109, %v110
  %v112 = vrot.slane %v111, 1
  %v113 = vadd.f32 %v111, %v112
  %v114 = vadd.f32 %v60, %v61
  %v115 = vrot.slane %v114, 4
  %v116 = vadd.f32 %v114, %v115
  %v117 = vrot.slane %v116, 2
  %v118 = vadd.f32 %v116, %v117
  %v119 = vrot.slane %v118, 1
  %v120 = vadd.f32 %v118, %v119
  %v121 = vadd.f32 %v62, %v63
  %v122 = vrot.slane %v121, 4
  %v123 = vadd.f32 %v121, %v122
  %v124 = vrot.slane %v123, 2
  %v125 = vadd.f32 %v123, %v124
  %v126 = vrot.slane %v125, 1
  %v127 = vadd.f32 %v125, %v126
  %vm128 = vcmask 1040384
  %v129 = vsel %vm128, %v104, %v113
  %vm130 = vcmask 1041408
  %v131 = vsel %vm130, %v129, %v120
  %vm132 = vcmask 1042432
  %v133 = vsel %vm132, %v131, %v127
  %vm134 = vcmask 1043456
  %v135 = vsel %vm134, %v133, 0.0
  %v136 = vld [vmem:[%s2] sm:$0xff]
  %v137 = vadd.f32 %v136, %v135
  %138 = vst [vmem:[%s2] sm:$0xff] %v137
  // Predicated region
  $region14: #{bce_dice_loss.1} parent=0 // pred_check
    _
  $region15: #{bce_dice_loss.1} parent=0 // pred_check_branch
    %140 = sbr.rel (0) target = $region17
  $region16: #{bce_dice_loss.1} parent=0 // pred_region
    _
  $region17: #{bce_dice_loss.1} parent=0 // pred_fallthru
    _
  // Predicated region
  $region18: #{bce_dice_loss.1} parent=0 // pred_check
    _
  $region19: #{bce_dice_loss.1} parent=0 // pred_check_branch
    %142 = sbr.rel (0) target = $region21
  $region20: #{bce_dice_loss.1} parent=0 // pred_region
    _
  $region21: #{bce_dice_loss.1} parent=0 // pred_fallthru
    _

</llo_original>
